<compile_context>
chip_gen: v7x
topology: tpu7x:2x2x1
jax: 0.10.0
libtpu: 0.0.40
codegen_flags: <defaults>
</compile_context>

<pallas_src>
import jax
import jax.numpy as jnp
from jax.experimental import pallas as pl
from jax.experimental.pallas import tpu as pltpu

LANE = 128        # vreg lane width — pad the output feature dim to this
SUBLANE = 8       # vreg sublane width — batch tiles are multiples of this
MAX_BATCH_TILE = 512  # ~85% of HBM roofline per measured tiling data


def _linear_sigmoid_kernel(x_ref, w_ref, b_ref, o_ref):
    # x_ref: (tm, D_in)       bf16   (batch tile)
    # w_ref: (D_in, D_out_p)  bf16   (resident: constant index_map)
    # b_ref: (1, D_out_p)     f32    (resident: constant index_map)
    # o_ref: (tm, D_out_p)    f32    (lane-dense: D_out_p % 128 == 0)
    z = jnp.dot(x_ref[...], w_ref[...],
                preferred_element_type=jnp.float32)      # MXU, f32 accumulate
    z = z + b_ref[...]                                   # VPU, broadcast bias
    # sigmoid(z) = 0.5 * (1 + tanh(0.5 * z)) — single EUP transcendental,
    # no overflow path, f32 elementwise (v5e-safe).
    o_ref[...] = (0.5 * (1.0 + jnp.tanh(0.5 * z))).astype(o_ref.dtype)


def prepare_params(weight, bias, lane=LANE):
    """One-time (init-time) prep of PyTorch-style Linear params.

    weight: (D_out, D_in) f32, bias: (D_out,) f32
      -> w_pad: (D_in, D_out_p) bf16   (transposed, zero-padded, lane-dense)
         b_pad: (1, D_out_p)    f32    (zero-padded)
         d_out: int
    """
    d_out, d_in = weight.shape
    d_out_p = ((d_out + lane - 1) // lane) * lane
    w_pad = (jnp.zeros((d_in, d_out_p), jnp.bfloat16)
             .at[:, :d_out].set(weight.T.astype(jnp.bfloat16)))
    b_pad = (jnp.zeros((1, d_out_p), jnp.float32)
             .at[0, :d_out].set(bias.astype(jnp.float32)))
    return w_pad, b_pad, d_out


def simple_classifier_forward(x, w_pad, b_pad, d_out, *, tm=None):
    """x: (B, D_in) f32, w_pad: (D_in, D_out_p) bf16, b_pad: (1, D_out_p) f32."""
    B, D_in = x.shape
    D_out_p = w_pad.shape[1]

    # Batch tile: whole (sublane-rounded) batch when small, capped for
    # VMEM-friendly double-buffering at scale.
    if tm is None:
        tm = min(((B + SUBLANE - 1) // SUBLANE) * SUBLANE, MAX_BATCH_TILE)
    b_pad_rows = ((B + tm - 1) // tm) * tm

    # Stream x as bf16 (halves HBM bytes of the dominant input stream).
    x_bf16 = x.astype(jnp.bfloat16)
    if b_pad_rows != B:
        x_bf16 = jnp.zeros((b_pad_rows, D_in), jnp.bfloat16).at[:B].set(x_bf16)

    grid = (b_pad_rows // tm,)

    cost = pl.CostEstimate(
        flops=2 * b_pad_rows * D_in * D_out_p + 3 * b_pad_rows * D_out_p,
        transcendentals=b_pad_rows * D_out_p,  # one tanh per output element
        bytes_accessed=(2 * (b_pad_rows * D_in + D_in * D_out_p)
                        + 4 * (D_out_p + b_pad_rows * D_out_p)),
    )

    out_padded = pl.pallas_call(
        _linear_sigmoid_kernel,
        out_shape=jax.ShapeDtypeStruct((b_pad_rows, D_out_p), jnp.float32),
        grid=grid,
        in_specs=[
            pl.BlockSpec((tm, D_in), lambda i: (i, 0)),        # x: tiled batch
            pl.BlockSpec((D_in, D_out_p), lambda i: (0, 0)),   # w: resident
            pl.BlockSpec((1, D_out_p), lambda i: (0, 0)),      # b: resident
        ],
        out_specs=pl.BlockSpec((tm, D_out_p), lambda i: (i, 0)),
        compiler_params=pltpu.CompilerParams(
            dimension_semantics=("parallel",)),                # v7x: 2 TCs
        cost_estimate=cost,
    )(x_bf16, w_pad, b_pad)

    # TODO(synk): if D_in grows past a few hundred, add a K grid axis
    # (reduction last) with a VMEM f32 accumulator and pl.when init/epilogue,
    # and pad D_in to a multiple of 128 at prep time.
    return out_padded[:B, :d_out]


if __name__ == "__main__":
    # Small shapes implied by the module: Linear(input_size, output_size)
    batch, input_size, output_size = 8, 32, 16

    key = jax.random.PRNGKey(0)
    kx, kw, kb = jax.random.split(key, 3)

    x = jax.random.normal(kx, (batch, input_size), dtype=jnp.float32)
    # PyTorch Linear-style parameters: weight (out, in), bias (out,)
    bound = 1.0 / jnp.sqrt(input_size)
    weight = jax.random.uniform(kw, (output_size, input_size),
                                dtype=jnp.float32, minval=-bound, maxval=bound)
    bias = jax.random.uniform(kb, (output_size,),
                              dtype=jnp.float32, minval=-bound, maxval=bound)

    # One-time parameter prep (transpose + bf16 cast + lane-dense padding).
    w_pad, b_pad, d_out = prepare_params(weight, bias)

    out = simple_classifier_forward(x, w_pad, b_pad, d_out)
    out = jax.block_until_ready(out)

    # Reference check in plain JAX (loose tolerance: bf16 matmul operands).
    ref = jax.nn.sigmoid(x @ weight.T + bias)
    assert out.shape == (batch, output_size)
    assert jnp.allclose(out, ref, atol=2e-2, rtol=2e-2), "mismatch vs reference"

    print("KERNEL_OK")
</pallas_src>

<mosaic_0001>
module attributes {stable_mosaic.version = 11 : i64} {
  func.func @_linear_sigmoid_kernel(%arg0: i32, %arg1: memref<8x32xbf16, #tpu.memory_space<vmem>>, %arg2: memref<32x128xbf16, #tpu.memory_space<vmem>>, %arg3: memref<1x128xf32, #tpu.memory_space<vmem>>, %arg4: memref<8x128xf32, #tpu.memory_space<vmem>>) attributes {dimension_semantics = [#tpu.dimension_semantics<parallel>], iteration_bounds = array<i64: 1>, scalar_prefetch = 0 : i64, scratch_operands = 0 : i64, tpu.core_type = #tpu.core_type<tc>, window_params = [{transform_indices = @transform_0, window_bounds = array<i64: 8, 32>}, {pipeline_mode = #tpu.pipeline_mode<synchronous>, transform_indices = @transform_1, window_bounds = array<i64: 32, 128>}, {pipeline_mode = #tpu.pipeline_mode<synchronous>, transform_indices = @transform_2, window_bounds = array<i64: 1, 128>}, {transform_indices = @transform_3, window_bounds = array<i64: 8, 128>}]} {
    %c0 = arith.constant 0 : index
    %c0_0 = arith.constant 0 : index
    %0 = vector.load %arg1[%c0, %c0_0] : memref<8x32xbf16, #tpu.memory_space<vmem>>, vector<8x32xbf16>
    %c0_1 = arith.constant 0 : index
    %c0_2 = arith.constant 0 : index
    %1 = vector.load %arg2[%c0_1, %c0_2] : memref<32x128xbf16, #tpu.memory_space<vmem>>, vector<32x128xbf16>
    %cst = arith.constant dense<0.000000e+00> : vector<8x128xf32>
    %2 = tpu.matmul %0, %1, %cst {dimension_numbers = #tpu.dot_dimension_numbers<[1], [0], [0], [1], [0, 0, 1, 1], [], []>} : vector<8x32xbf16>, vector<32x128xbf16>, vector<8x128xf32> -> vector<8x128xf32>
    %c0_3 = arith.constant 0 : index
    %c0_4 = arith.constant 0 : index
    %3 = vector.load %arg3[%c0_3, %c0_4] : memref<1x128xf32, #tpu.memory_space<vmem>>, vector<1x128xf32>
    %4 = vector.broadcast %3 : vector<1x128xf32> to vector<8x128xf32>
    %5 = arith.addf %2, %4 : vector<8x128xf32>
    %cst_5 = arith.constant 5.000000e-01 : f32
    %6 = vector.broadcast %cst_5 : f32 to vector<8x128xf32>
    %7 = arith.mulf %6, %5 : vector<8x128xf32>
    %8 = math.tanh %7 : vector<8x128xf32>
    %cst_6 = arith.constant 1.000000e+00 : f32
    %9 = vector.broadcast %cst_6 : f32 to vector<8x128xf32>
    %10 = arith.addf %9, %8 : vector<8x128xf32>
    %cst_7 = arith.constant 5.000000e-01 : f32
    %11 = vector.broadcast %cst_7 : f32 to vector<8x128xf32>
    %12 = arith.mulf %11, %10 : vector<8x128xf32>
    %c0_8 = arith.constant 0 : index
    %c0_9 = arith.constant 0 : index
    %13 = vector.load %arg4[%c0_8, %c0_9] : memref<8x128xf32, #tpu.memory_space<vmem>>, vector<8x128xf32>
    tpu.vector_store %arg4[%c0_8, %c0_9], %12 {strides = array<i32>} : memref<8x128xf32, #tpu.memory_space<vmem>>, vector<8x128xf32>,
    return
  }
  func.func @transform_0(%arg0: i32) -> (i32, i32) {
    %c0_i32 = arith.constant 0 : i32
    %c0_i32_0 = arith.constant 0 : i32
    return %arg0, %c0_i32 : i32, i32
  }
  func.func @transform_1(%arg0: i32) -> (i32, i32) {
    %c0_i32 = arith.constant 0 : i32
    %c0_i32_0 = arith.constant 0 : i32
    %c0_i32_1 = arith.constant 0 : i32
    return %c0_i32, %c0_i32_0 : i32, i32
  }
  func.func @transform_2(%arg0: i32) -> (i32, i32) {
    %c0_i32 = arith.constant 0 : i32
    %c0_i32_0 = arith.constant 0 : i32
    %c0_i32_1 = arith.constant 0 : i32
    return %c0_i32, %c0_i32_0 : i32, i32
  }
  func.func @transform_3(%arg0: i32) -> (i32, i32) {
    %c0_i32 = arith.constant 0 : i32
    %c0_i32_0 = arith.constant 0 : i32
    return %arg0, %c0_i32 : i32, i32
  }
}

</mosaic_0001>

<llo_original>
// kernel: tpu_custom_call.1
$region0: #{tpu_custom_call.1}
  #allocation0 [shape = 'u32[]', space=smem, size = 0x4, offset = 0x4, fixed_abs, tag = 'smem constant byte address 0x4 - core index']
  #allocation1 [shape = 'u32[144,128]{1,0:T(1,128)}', space=vmem, size = 0x12000, scoped, tag = 'internal scratch']
  %s0 = inlined_call_operand.hbm [shape: bf16[8,32], index: 0, kind: input, shape index: {}]
  %s1 = inlined_call_operand.hbm [shape: bf16[32,128], index: 1, kind: input, shape index: {}]
  %s2 = inlined_call_operand.vmem [shape: f32[1,128], index: 2, kind: input, shape index: {}]
  %s3 = inlined_call_operand.hbm [shape: f32[8,128], index: 3, kind: output, shape index: {}]
  %s4 = sld [smem:[#allocation0]]
  $region30: #{tpu_custom_call.1} parent=0
    _
  %s6 = ssub.s32 1, %s4
  %s7 = scalar_select 0, %s6, %s4
  $region1: #{tpu_custom_call.1} parent=0
    #allocation2 [shape = 'u8[2048]{0}', space=vmem, size = 0x800, scoped, tag = 'input window, operand 0, single buffered']
    #allocation3 [shape = 's32[1]{0}', space=sflag, size = 0x4, scoped, tag = 'scoped memory for tpu_custom_call.1']
    #allocation4 [shape = 's32[1]{0}', space=sflag, size = 0x4, scoped, tag = 'scoped memory for tpu_custom_call.1']
    #allocation5 [shape = 'u8[8192]{0}', space=vmem, size = 0x2000, scoped, tag = 'input window, operand 1, single buffered']
    #allocation6 [shape = 's32[1]{0}', space=sflag, size = 0x4, scoped, tag = 'scoped memory for tpu_custom_call.1']
    #allocation7 [shape = 'u8[4096]{0}', space=vmem, size = 0x1000, scoped, tag = 'output window, operand 0, single buffered']
    %8 = vsyncpa [#allocation3], 0
    %9 = vsyncpa [#allocation6], 0
    %10 = vsyncpa [#allocation4], 0
    // Predicated region
    $region2: #{tpu_custom_call.1} parent=1 // pred_check
      _
    $region3: #{tpu_custom_call.1} parent=1 // pred_check_branch
      %12 = sbr.rel (0) target = $region5
    $region4: #{tpu_custom_call.1} parent=1 // pred_region
      %s14 = ssub.s32 64, 64
      %15 = vsyncadd [#allocation3], %s14
      %s17 = sshll.u32 [#allocation2], 4
      %s18 = int_to_ptr.vmem [resolvable:$true] %s17
      %20 = dma.hbm_to_vmem [thread:$0]  %s0, 64, %s18, [#allocation3]
    $region5: #{tpu_custom_call.1} parent=1 // pred_fallthru
      _
    // Predicated region
    $region6: #{tpu_custom_call.1} parent=1 // pred_check
      _
    $region7: #{tpu_custom_call.1} parent=1 // pred_check_branch
      %22 = sbr.rel (0) target = $region9
    $region8: #{tpu_custom_call.1} parent=1 // pred_region
      %s24 = ssub.s32 256, 256
      %25 = vsyncadd [#allocation6], %s24
      %s26 = sshll.u32 [#allocation5], 4
      %s27 = int_to_ptr.vmem [resolvable:$true] %s26
      %32 = dma.hbm_to_vmem [thread:$0]  %s1, 256, %s27, [#allocation6], 64, 64, 4
    $region9: #{tpu_custom_call.1} parent=1 // pred_fallthru
      _
    // Predicated region
    $region10: #{tpu_custom_call.1} parent=1 // pred_check
      _
    $region11: #{tpu_custom_call.1} parent=1 // pred_check_branch
      %34 = sbr.rel (0) target = $region13
    $region12: #{tpu_custom_call.1} parent=1 // pred_region
      _
    $region13: #{tpu_custom_call.1} parent=1 // pred_fallthru
      _
    // Predicated region
    $region14: #{tpu_custom_call.1} parent=1 // pred_check
      _
    $region15: #{tpu_custom_call.1} parent=1 // pred_check_branch
      %36 = sbr.rel (0) target = $region17
    $region16: #{tpu_custom_call.1} parent=1 // pred_region
      %37 = dma.done [#allocation3], 64
    $region17: #{tpu_custom_call.1} parent=1 // pred_fallthru
      _
    // Predicated region
    $region18: #{tpu_custom_call.1} parent=1 // pred_check
      _
    $region19: #{tpu_custom_call.1} parent=1 // pred_check_branch
      %39 = sbr.rel (0) target = $region21
    $region20: #{tpu_custom_call.1} parent=1 // pred_region
      %40 = dma.done [#allocation6], 256
    $region21: #{tpu_custom_call.1} parent=1 // pred_fallthru
      _
    %v42 = vld [vmem:[#allocation2] sm:$0xf]
    %v43 = vld [vmem:[#allocation5] sm:$0xf]
    %v44 = vld [vmem:[#allocation5 + $0x4] sm:$0xf]
    %v45 = vld [vmem:[#allocation5 + $0x8] sm:$0xf]
    %v46 = vld [vmem:[#allocation5 + $0xc] sm:$0xf]
    %v47 = vld [vmem:[%s2] sm:$0x1]
    %v49 = vlaneseq
    %v50 = vshrl.u32 %v49, 7
    %v51 = vsub.s32 0, %v50
    %v52 = vrot.slane %v47, %v51
    %v58 = vunpack.c.l.b16 %v43
    %v59 = vunpack.c.l.b16 %v44
    %v60 = vunpack.c.l.b16 %v45
    %v61 = vunpack.c.l.b16 %v46
    %v62 = vpack.c.b16 %v59, %v58
    %v63 = vpack.c.b16 %v61, %v60
    %vm66 = vcmask 261120
    %v68 = vsel %vm66, %v42, 0
    %70 = vmatprep.subr.bf16.mxu0 0
    %71 = vmatpush1.bf16.msra.mxu0 %v62
    %72 = vmatprep.subr.bf16.mxu0 0
    %73 = vmatpush1.bf16.msra.mxu0 %v63
    %74 = vmatprep.subr.bf16.mxu0 0
    %75 = vmatpush1.bf16.msra.mxu0 0
    %76 = vmatprep.subr.bf16.mxu0 0
    %77 = vmatpush1.bf16.msra.mxu0 0
    %78 = vmatprep.subr.bf16.mxu0 0
    %79 = vmatpush1.bf16.msra.mxu0 0
    %80 = vmatprep.subr.bf16.mxu0 0
    %81 = vmatpush1.bf16.msra.mxu0 0
    %82 = vmatprep.subr.bf16.mxu0 0
    %83 = vmatpush1.bf16.msra.mxu0 0
    %84 = vmatprep.subr.bf16.mxu0 0
    %85 = vmatpush1.bf16.msra.mxu0 0
    %86 = vmatprep.subr.bf16.mxu0 0
    %87 = vmatpush1.bf16.msra.mxu0 0
    %88 = vmatprep.subr.bf16.mxu0 0
    %89 = vmatpush1.bf16.msra.mxu0 0
    %90 = vmatprep.subr.bf16.mxu0 0
    %91 = vmatpush1.bf16.msra.mxu0 0
    %92 = vmatprep.subr.bf16.mxu0 0
    %93 = vmatpush1.bf16.msra.mxu0 0
    %94 = vmatprep.subr.bf16.mxu0 0
    %95 = vmatpush1.bf16.msra.mxu0 0
    %96 = vmatprep.subr.bf16.mxu0 0
    %97 = vmatpush1.bf16.msra.mxu0 0
    %98 = vmatprep.subr.bf16.mxu0 0
    %99 = vmatpush1.bf16.msra.mxu0 0
    %100 = vmatprep.subr.bf16.mxu0 0
    %101 = vmatpush1.bf16.msra.mxu0 0
    %102 = vmatprep.mubr.bf16.mxu0 0
    %103 = vmatmul.mubr.bf16.gmra.mrb[0].mxu0 %v68
    %v104 = vpop.f32.mrb[0].mxu0
    %v105 = vadd.f32 %v52, %v104
    %v106 = vpop.f32.mrb[0].mxu0
    %v107 = vpop.f32.mrb[0].mxu0
    %v108 = vpop.f32.mrb[0].mxu0
    %109 = vdwg.mxu0
    %v110 = vmul.f32 %v105, 0.5
    %v111 = vtanh.pop %v110
    %v112 = vadd.f32 %v111, 1.0
    %v113 = vmul.f32 %v112, 0.5
    %114 = vst [vmem:[#allocation7] sm:$0xff] %v113
    // Predicated region
    $region22: #{tpu_custom_call.1} parent=1 // pred_check
      _
    $region23: #{tpu_custom_call.1} parent=1 // pred_check_branch
      %116 = sbr.rel (0) target = $region25
    $region24: #{tpu_custom_call.1} parent=1 // pred_region
      %s118 = ssub.s32 128, 128
      %119 = vsyncadd [#allocation4], %s118
      %s121 = sshll.u32 [#allocation7], 4
      %s122 = int_to_ptr.vmem [resolvable:$true] %s121
      %124 = dma.vmem_to_hbm [thread:$0]  %s122, 128, %s3, [#allocation4]
    $region25: #{tpu_custom_call.1} parent=1 // pred_fallthru
      _
    // Predicated region
    $region26: #{tpu_custom_call.1} parent=1 // pred_check
      _
    $region27: #{tpu_custom_call.1} parent=1 // pred_check_branch
      %126 = sbr.rel (0) target = $region29
    $region28: #{tpu_custom_call.1} parent=1 // pred_region
      %127 = dma.done [#allocation4], 128
    $region29: #{tpu_custom_call.1} parent=1 // pred_fallthru
      _
    %128 = vsyncpa [#allocation3], 1
    %129 = vsyncpa [#allocation6], 1
    %130 = vsyncpa [#allocation4], 1

</llo_original>
